<compile_context>
chip_gen: v5e
topology: v5e:2x2
jax: 0.10.0
libtpu: 0.0.40
codegen_flags: <defaults>
</compile_context>

<pallas_src>
import functools
import jax
import jax.numpy as jnp
from jax import lax
from jax.experimental import pallas as pl
from jax.experimental.pallas import tpu as pltpu

# ---- static module configuration (matches SC(channels=8) defaults) ----------
CHANNELS = 8
GROUP_NUM = 4
GATE_T = 0.5
ALPHA = 0.5
SQUEEZE = 2
CONV_GROUPS = 2
UP_C = int(CHANNELS * ALPHA)          # 4
LOW_C = CHANNELS - UP_C               # 4
S_UP = UP_C // SQUEEZE                # 2
S_LOW = LOW_C // SQUEEZE              # 2
OPG = CHANNELS // CONV_GROUPS         # gwc output channels per group (4)
GN_EPS = 1e-5
LANE = 128

# The kernel hard-codes these structural relationships; guard against silent breakage.
assert CHANNELS % 8 == 0, "sublane-aligned channel count required"
assert CHANNELS % GROUP_NUM == 0 and CHANNELS // GROUP_NUM == 2, \
    "GroupNorm pair-sum path assumes exactly 2 channels per group"
assert UP_C == CHANNELS // 2, "SRU half-swap and CRU split both assume a C/2 split"
assert CHANNELS & (CHANNELS - 1) == 0, "softmax butterfly reduce assumes C power of two"
assert S_UP % CONV_GROUPS == 0 and S_UP // CONV_GROUPS == 1, \
    "gwc weight reshaped to (C, 9) requires exactly 1 input channel per group"
assert CHANNELS % CONV_GROUPS == 0 and OPG * CONV_GROUPS == CHANNELS


def sc_kernel(W, HW, R, padded,
              x_ref, pc_ref, wf_ref, mask_ref, o_ref):
    C = CHANNELS
    half = C // 2

    def roll(v, shift, axis):
        n = v.shape[axis]
        return pltpu.roll(v, shift % n, axis=axis)

    # ---- resident constants (loaded once per grid step; no per-image loop) ----
    pc = pc_ref[...]                       # (R, 13) per-channel params, tiled per image
    gamma = pc[:, 0:1]
    beta = pc[:, 1:2]
    w_gate = pc[:, 2:3]                    # gamma / sum(gamma), precomputed host-side
    bg = pc[:, 3:4]                        # gwc bias
    wg = pc[:, 4:13]                       # (R, 9) 3x3 taps, k = kh*3 + kw
    wf = wf_ref[...]                       # (3R, R) block-diagonal fused CRU weight
    masks = mask_ref[...].astype(jnp.float32)       # (5, HW_pad), bf16 -> f32 once
    mw_m, mw_p = masks[0:1], masks[1:2]    # column masks for dw = -1 / +1
    mh_m, mh_p = masks[2:3], masks[3:4]    # row masks for dh = -1 / +1
    valid = masks[4:5]                     # 1 on true HW lanes, 0 on pad lanes

    rid = lax.broadcasted_iota(jnp.int32, (R, 1), 0)   # global row index in the slab

    # NOTE(padding): x pad lanes are zero, so the GroupNorm sums below are exact.
    # gn/sru/up_rep/y1/y2 carry garbage in pad lanes; it is neutralized by
    # (a) the zero-padded boundary masks applied to every lane roll,
    # (b) the `valid` mask in the GAP, (c) the wrapper's final [:, :HW] slice.
    x = x_ref[...].astype(jnp.float32)     # (R, HW_pad)

    # ============================== SRU ==============================
    # GroupNorm(GROUP_NUM, C): one-pass stats + sublane pair-sum (2 channels/group).
    inv_n = 1.0 / float((C // GROUP_NUM) * HW)
    ch_sum = jnp.sum(x, axis=1, keepdims=True)          # (R, 1)
    ch_sq = jnp.sum(x * x, axis=1, keepdims=True)       # (R, 1)

    def pair_sum(col):
        partner = jnp.where(rid % 2 == 0, roll(col, -1, 0), roll(col, 1, 0))
        return col + partner

    mean = pair_sum(ch_sum) * inv_n
    var = jnp.maximum(pair_sum(ch_sq) * inv_n - mean * mean, 0.0)
    coef = lax.rsqrt(var + GN_EPS) * gamma
    gn = (x - mean) * coef + beta                        # (R, HW_pad)

    # gate / split / half-channel swap (per-image partner = channel xor C/2)
    gate = jax.nn.sigmoid(w_gate * gn)
    x1 = jnp.where(gate >= GATE_T, gn, 0.0)
    x2 = gn - x1                                         # exact complement
    upper = (rid % C) < half
    partner = jnp.where(upper, roll(x2, -half, 0), roll(x2, half, 0))
    sru = x1 + partner                                   # (R, HW_pad)

    # ============================== CRU ==============================
    # Split + squeeze_up/low + pwc1 + pwc2 + the y2 concat, all fused into one
    # block-diagonal weight and evaluated on the (otherwise idle) MXU.
    f32 = jnp.float32
    up_rep = jnp.dot(wf[0:R], sru, preferred_element_type=f32)         # squeeze_up, one row / gwc out-channel
    y2 = jnp.dot(wf[R:2 * R], sru, preferred_element_type=f32)         # concat(low, pwc2(low))
    y1 = jnp.dot(wf[2 * R:3 * R], sru, preferred_element_type=f32) + bg  # pwc1(up) + gwc bias

    # grouped 3x3 conv, separable: 2 lane rolls + 2 row rolls + 4 mask multiplies.
    t_m = roll(up_rep, 1, 1) * mw_m        # tap from (w-1)
    t_p = roll(up_rep, -1, 1) * mw_p       # tap from (w+1)
    row_m = wg[:, 0:1] * t_m + wg[:, 1:2] * up_rep + wg[:, 2:3] * t_p   # kh = 0 (h-1)
    row_0 = wg[:, 3:4] * t_m + wg[:, 4:5] * up_rep + wg[:, 5:6] * t_p   # kh = 1
    row_p = wg[:, 6:7] * t_m + wg[:, 7:8] * up_rep + wg[:, 8:9] * t_p   # kh = 2 (h+1)
    y1 = y1 + row_0 + roll(row_m, W, 1) * mh_m + roll(row_p, -W, 1) * mh_p

    # ---- fuse: GAP over the true HW + softmax over the 2C channels of each image ----
    inv_hw = 1.0 / float(HW)
    if padded:
        gap1 = jnp.sum(y1 * valid, axis=1, keepdims=True) * inv_hw
        gap2 = jnp.sum(y2 * valid, axis=1, keepdims=True) * inv_hw
    else:
        gap1 = jnp.sum(y1, axis=1, keepdims=True) * inv_hw
        gap2 = jnp.sum(y2, axis=1, keepdims=True) * inv_hw

    def seg_allreduce(col, op):
        # butterfly all-reduce within each aligned segment of C rows (C power of 2);
        # the selected partner never crosses an image boundary.
        out = col
        s = 1
        while s < C:
            out = op(out, jnp.where((rid & s) == 0, roll(out, -s, 0), roll(out, s, 0)))
            s *= 2
        return out

    m = seg_allreduce(jnp.maximum(gap1, gap2), jnp.maximum)   # per-image max over 2C
    e1 = jnp.exp(gap1 - m)
    e2 = jnp.exp(gap2 - m)
    den = seg_allreduce(e1 + e2, jnp.add)                      # per-image sum over 2C
    s1 = e1 / den
    s2 = e2 / den
    o_ref[...] = (y1 * s1 + y2 * s2).astype(o_ref.dtype)


def _vmem_capacity_bytes():
    try:
        cap = getattr(pltpu.get_tpu_info(), "vmem_capacity_bytes", None)
        if cap:
            return int(cap)
    except Exception:
        pass
    return 64 << 20        # conservative fallback = v7x physical VMEM


def _tensorcores_per_chip():
    try:
        info = pltpu.get_tpu_info()
        for name in ("num_tensorcores", "tensorcores_per_chip", "num_cores",
                     "cores_per_chip", "core_count"):
            v = getattr(info, name, None)
            if v:
                return int(v)
    except Exception:
        pass
    return 2               # conservative: assume megacore so both TCs get work


def _pick_batch_tile(B, HW_pad, vmem_limit):
    """Largest divisor of B that fits the VMEM budget; keep >=2 grid steps only on
    multi-TensorCore chips (v7x / megacore) so both cores get work."""
    slab = CHANNELS * HW_pad * 4
    per_image = 20 * slab               # ~16 live f32 (C,HW) temps + buffered I/O blocks
    cap = max(1, (vmem_limit // 2) // per_image)
    if B > 1 and _tensorcores_per_chip() >= 2:
        cap = min(cap, max(1, B // 2))
    bt = max(1, min(B, cap, 8))
    while B % bt:
        bt -= 1
    return bt


def sc_forward(x, params, batch_tile=None):
    B, C, H, W = x.shape
    assert C == CHANNELS
    HW = H * W
    HW_pad = ((HW + LANE - 1) // LANE) * LANE
    padded = HW_pad != HW

    vmem_limit = min(_vmem_capacity_bytes() * 3 // 4, 96 << 20)
    if batch_tile is None:
        batch_tile = _pick_batch_tile(B, HW_pad, vmem_limit)
    assert B % batch_tile == 0
    R = batch_tile * C
    # TODO(synk): for B == 1 on dual-TC chips (v7x), add a second "parallel" grid axis
    # that splits HW in two halves (one-row halo handled by the same boundary masks).

    # batch flattened into the sublane axis: (B*C, HW_pad), zero lane padding.
    x2 = x.reshape(B * C, HW)
    if padded:
        x2 = jnp.pad(x2, ((0, 0), (0, HW_pad - HW)))

    # ---- separable 3x3 boundary masks (4 rows) + valid-lane mask, stored bf16 ----
    hh = jnp.arange(H, dtype=jnp.int32)[:, None]
    ww = jnp.arange(W, dtype=jnp.int32)[None, :]
    ones_h = jnp.ones((H, 1), jnp.float32)
    ones_w = jnp.ones((1, W), jnp.float32)
    mw_m = (ones_h * (ww >= 1).astype(jnp.float32)).reshape(1, HW)       # (w-1) valid
    mw_p = (ones_h * (ww <= W - 2).astype(jnp.float32)).reshape(1, HW)   # (w+1) valid
    mh_m = ((hh >= 1).astype(jnp.float32) * ones_w).reshape(1, HW)       # (h-1) valid
    mh_p = ((hh <= H - 2).astype(jnp.float32) * ones_w).reshape(1, HW)   # (h+1) valid
    mask = jnp.concatenate(
        [mw_m, mw_p, mh_m, mh_p, jnp.ones((1, HW), jnp.float32)], axis=0)
    if padded:
        mask = jnp.pad(mask, ((0, 0), (0, HW_pad - HW)))
    mask = mask.astype(jnp.bfloat16)                                     # (5, HW_pad)

    # ---- per-channel params packed into one operand and tiled to (R, 13) ----
    gamma = params["gn_gamma"].reshape(C, 1).astype(jnp.float32)
    beta = params["gn_beta"].reshape(C, 1).astype(jnp.float32)
    w_gate = gamma / jnp.sum(gamma)
    bg = params["b_gwc"].reshape(C, 1).astype(jnp.float32)
    wg = params["w_gwc"].reshape(C, 9).astype(jnp.float32)               # ipg == 1
    pc = jnp.concatenate([gamma, beta, w_gate, bg, wg], axis=1)          # (C, 13)
    pc = jnp.tile(pc, (batch_tile, 1))                                   # (R, 13)

    # ---- fused block-diagonal CRU weight: bands [up_rep ; y2 ; pwc1(up)] -> (3R, R) ----
    wsu = params["w_squeeze_up"].astype(jnp.float32)                     # (S_UP, UP_C)
    wsl = params["w_squeeze_low"].astype(jnp.float32)                    # (S_LOW, LOW_C)
    wp1 = params["w_pwc1"].astype(jnp.float32)                           # (C, S_UP)
    wp2 = params["w_pwc2"].astype(jnp.float32)                           # (C-S_LOW, S_LOW)
    wsur = jnp.repeat(wsu, OPG, axis=0)                                  # (C, UP_C)
    w_up = jnp.zeros((C, C), jnp.float32).at[:, :UP_C].set(wsur)         # up_rep = w_up @ sru
    w_y2 = jnp.zeros((C, C), jnp.float32)
    w_y2 = w_y2.at[:S_LOW, UP_C:].set(wsl)                               # low rows
    w_y2 = w_y2.at[S_LOW:, UP_C:].set(wp2 @ wsl)                         # pwc2(low) rows
    w_y1 = jnp.zeros((C, C), jnp.float32).at[:, :UP_C].set(wp1 @ wsu)    # pwc1(up)
    eye = jnp.eye(batch_tile, dtype=jnp.float32)
    wf = jnp.concatenate([jnp.kron(eye, w_up), jnp.kron(eye, w_y2),
                          jnp.kron(eye, w_y1)], axis=0)                  # (3R, R)

    kernel = functools.partial(sc_kernel, W, HW, R, padded)
    out = pl.pallas_call(
        kernel,
        out_shape=jax.ShapeDtypeStruct((B * C, HW_pad), x.dtype),
        grid_spec=pltpu.PrefetchScalarGridSpec(
            num_scalar_prefetch=0,
            grid=(B // batch_tile,),
            in_specs=[pl.BlockSpec((R, HW_pad), lambda b: (b, 0)),
                      pl.BlockSpec(pc.shape, lambda b: (0, 0)),
                      pl.BlockSpec(wf.shape, lambda b: (0, 0)),
                      pl.BlockSpec(mask.shape, lambda b: (0, 0))],
            out_specs=pl.BlockSpec((R, HW_pad), lambda b: (b, 0)),
        ),
        compiler_params=pltpu.CompilerParams(
            dimension_semantics=("parallel",),
            vmem_limit_bytes=int(vmem_limit)),
    )(x2, pc, wf, mask)

    if padded:
        out = out[:, :HW]
    return out.reshape(B, C, H, W)


if __name__ == "__main__":
    B, H, W = 2, 16, 16
    key = jax.random.PRNGKey(0)
    ks = jax.random.split(key, 9)
    x = jax.random.normal(ks[0], (B, CHANNELS, H, W), jnp.float32)
    params = {
        "gn_gamma": jax.random.uniform(ks[1], (CHANNELS,), jnp.float32, 0.5, 1.5),
        "gn_beta": 0.1 * jax.random.normal(ks[2], (CHANNELS,), jnp.float32),
        "w_squeeze_up": 0.3 * jax.random.normal(ks[3], (S_UP, UP_C), jnp.float32),
        "w_squeeze_low": 0.3 * jax.random.normal(ks[4], (S_LOW, LOW_C), jnp.float32),
        "w_gwc": 0.2 * jax.random.normal(
            ks[5], (CHANNELS, S_UP // CONV_GROUPS, 3, 3), jnp.float32),
        "b_gwc": 0.1 * jax.random.normal(ks[6], (CHANNELS,), jnp.float32),
        "w_pwc1": 0.3 * jax.random.normal(ks[7], (CHANNELS, S_UP), jnp.float32),
        "w_pwc2": 0.3 * jax.random.normal(
            ks[8], (CHANNELS - S_LOW, S_LOW), jnp.float32),
    }
    out = sc_forward(x, params)
    jax.block_until_ready(out)
    assert out.shape == (B, CHANNELS, H, W)
    assert bool(jnp.isfinite(out).all())
    print("KERNEL_OK")
</pallas_src>

<mosaic_0001>
module attributes {stable_mosaic.version = 11 : i64} {
  func.func @sc_kernel(%arg0: i32, %arg1: memref<8x256xf32, #tpu.memory_space<vmem>>, %arg2: memref<8x13xf32, #tpu.memory_space<vmem>>, %arg3: memref<24x8xf32, #tpu.memory_space<vmem>>, %arg4: memref<5x256xbf16, #tpu.memory_space<vmem>>, %arg5: memref<8x256xf32, #tpu.memory_space<vmem>>) attributes {dimension_semantics = [#tpu.dimension_semantics<parallel>], iteration_bounds = array<i64: 2>, scalar_prefetch = 0 : i64, scratch_operands = 0 : i64, tpu.core_type = #tpu.core_type<tc>, window_params = [{transform_indices = @transform_0, window_bounds = array<i64: 8, 256>}, {pipeline_mode = #tpu.pipeline_mode<synchronous>, transform_indices = @transform_1, window_bounds = array<i64: 8, 13>}, {pipeline_mode = #tpu.pipeline_mode<synchronous>, transform_indices = @transform_2, window_bounds = array<i64: 24, 8>}, {pipeline_mode = #tpu.pipeline_mode<synchronous>, transform_indices = @transform_3, window_bounds = array<i64: 5, 256>}, {transform_indices = @transform_4, window_bounds = array<i64: 8, 256>}]} {
    %c0 = arith.constant 0 : index
    %c0_0 = arith.constant 0 : index
    %0 = vector.load %arg2[%c0, %c0_0] : memref<8x13xf32, #tpu.memory_space<vmem>>, vector<8x13xf32>
    %1 = vector.extract_strided_slice %0 {offsets = [0, 0], sizes = [8, 1], strides = [1, 1]} : vector<8x13xf32> to vector<8x1xf32>
    %2 = vector.extract_strided_slice %0 {offsets = [0, 1], sizes = [8, 1], strides = [1, 1]} : vector<8x13xf32> to vector<8x1xf32>
    %3 = vector.extract_strided_slice %0 {offsets = [0, 2], sizes = [8, 1], strides = [1, 1]} : vector<8x13xf32> to vector<8x1xf32>
    %4 = vector.extract_strided_slice %0 {offsets = [0, 3], sizes = [8, 1], strides = [1, 1]} : vector<8x13xf32> to vector<8x1xf32>
    %5 = vector.extract_strided_slice %0 {offsets = [0, 4], sizes = [8, 9], strides = [1, 1]} : vector<8x13xf32> to vector<8x9xf32>
    %c0_1 = arith.constant 0 : index
    %c0_2 = arith.constant 0 : index
    %6 = vector.load %arg3[%c0_1, %c0_2] : memref<24x8xf32, #tpu.memory_space<vmem>>, vector<24x8xf32>
    %c0_3 = arith.constant 0 : index
    %c0_4 = arith.constant 0 : index
    %7 = vector.load %arg4[%c0_3, %c0_4] : memref<5x256xbf16, #tpu.memory_space<vmem>>, vector<5x256xbf16>
    %8 = arith.extf %7 : vector<5x256xbf16> to vector<5x256xf32>
    %9 = vector.extract_strided_slice %8 {offsets = [0, 0], sizes = [1, 256], strides = [1, 1]} : vector<5x256xf32> to vector<1x256xf32>
    %10 = vector.extract_strided_slice %8 {offsets = [1, 0], sizes = [1, 256], strides = [1, 1]} : vector<5x256xf32> to vector<1x256xf32>
    %11 = vector.extract_strided_slice %8 {offsets = [2, 0], sizes = [1, 256], strides = [1, 1]} : vector<5x256xf32> to vector<1x256xf32>
    %12 = vector.extract_strided_slice %8 {offsets = [3, 0], sizes = [1, 256], strides = [1, 1]} : vector<5x256xf32> to vector<1x256xf32>
    %13 = tpu.iota {dimensions = array<i32: 0>} : vector<8x1xi32>
    %c0_5 = arith.constant 0 : index
    %c0_6 = arith.constant 0 : index
    %14 = vector.load %arg1[%c0_5, %c0_6] : memref<8x256xf32, #tpu.memory_space<vmem>>, vector<8x256xf32>
    %cst = arith.constant dense<0.000000e+00> : vector<8xf32>
    %15 = vector.multi_reduction <add>, %14, %cst [1] : vector<8x256xf32> to vector<8xf32>
    %16 = vector.shape_cast %15 : vector<8xf32> to vector<8x1xf32>
    %17 = arith.mulf %14, %14 : vector<8x256xf32>
    %cst_7 = arith.constant dense<0.000000e+00> : vector<8xf32>
    %18 = vector.multi_reduction <add>, %17, %cst_7 [1] : vector<8x256xf32> to vector<8xf32>
    %19 = vector.shape_cast %18 : vector<8xf32> to vector<8x1xf32>
    %c2_i32 = arith.constant 2 : i32
    %c0_i32 = arith.constant 0 : i32
    %20 = arith.cmpi eq, %c2_i32, %c0_i32 : i32
    %c1_i32 = arith.constant 1 : i32
    %21 = arith.select %20, %c1_i32, %c2_i32 : i32
    %22 = vector.broadcast %21 : i32 to vector<8x1xi32>
    %23 = arith.remsi %13, %22 : vector<8x1xi32>
    %c0_i32_8 = arith.constant 0 : i32
    %24 = vector.broadcast %c0_i32_8 : i32 to vector<8x1xi32>
    %25 = arith.cmpi ne, %23, %24 : vector<8x1xi32>
    %c0_i32_9 = arith.constant 0 : i32
    %26 = vector.broadcast %c0_i32_9 : i32 to vector<8x1xi32>
    %27 = arith.cmpi slt, %23, %26 : vector<8x1xi32>
    %c0_i32_10 = arith.constant 0 : i32
    %28 = arith.cmpi slt, %21, %c0_i32_10 : i32
    %29 = vector.broadcast %28 : i1 to vector<8x1xi1>
    %30 = vector.broadcast %29 : vector<8x1xi1> to vector<8x1xi1>
    %31 = arith.xori %27, %30 : vector<8x1xi1>
    %32 = arith.andi %31, %25 : vector<8x1xi1>
    %33 = vector.broadcast %21 : i32 to vector<8x1xi32>
    %34 = arith.addi %23, %33 : vector<8x1xi32>
    %35 = arith.select %32, %34, %23 : vector<8x1xi1>, vector<8x1xi32>
    %c0_i32_11 = arith.constant 0 : i32
    %36 = vector.broadcast %c0_i32_11 : i32 to vector<8x1xi32>
    %37 = arith.cmpi eq, %35, %36 : vector<8x1xi32>
    %c7_i32 = arith.constant 7 : i32
    %38 = tpu.dynamic_rotate %16 by %c7_i32 dim 0 : vector<8x1xf32>, i32 -> vector<8x1xf32>
    %c1_i32_12 = arith.constant 1 : i32
    %39 = tpu.dynamic_rotate %16 by %c1_i32_12 dim 0 : vector<8x1xf32>, i32 -> vector<8x1xf32>
    %40 = arith.select %37, %38, %39 : vector<8x1xi1>, vector<8x1xf32>
    %41 = arith.addf %16, %40 : vector<8x1xf32>
    %cst_13 = arith.constant 0.001953125 : f32
    %42 = vector.broadcast %cst_13 : f32 to vector<8x1xf32>
    %43 = arith.mulf %41, %42 : vector<8x1xf32>
    %c2_i32_14 = arith.constant 2 : i32
    %c0_i32_15 = arith.constant 0 : i32
    %44 = arith.cmpi eq, %c2_i32_14, %c0_i32_15 : i32
    %c1_i32_16 = arith.constant 1 : i32
    %45 = arith.select %44, %c1_i32_16, %c2_i32_14 : i32
    %46 = vector.broadcast %45 : i32 to vector<8x1xi32>
    %47 = arith.remsi %13, %46 : vector<8x1xi32>
    %c0_i32_17 = arith.constant 0 : i32
    %48 = vector.broadcast %c0_i32_17 : i32 to vector<8x1xi32>
    %49 = arith.cmpi ne, %47, %48 : vector<8x1xi32>
    %c0_i32_18 = arith.constant 0 : i32
    %50 = vector.broadcast %c0_i32_18 : i32 to vector<8x1xi32>
    %51 = arith.cmpi slt, %47, %50 : vector<8x1xi32>
    %c0_i32_19 = arith.constant 0 : i32
    %52 = arith.cmpi slt, %45, %c0_i32_19 : i32
    %53 = vector.broadcast %52 : i1 to vector<8x1xi1>
    %54 = vector.broadcast %53 : vector<8x1xi1> to vector<8x1xi1>
    %55 = arith.xori %51, %54 : vector<8x1xi1>
    %56 = arith.andi %55, %49 : vector<8x1xi1>
    %57 = vector.broadcast %45 : i32 to vector<8x1xi32>
    %58 = arith.addi %47, %57 : vector<8x1xi32>
    %59 = arith.select %56, %58, %47 : vector<8x1xi1>, vector<8x1xi32>
    %c0_i32_20 = arith.constant 0 : i32
    %60 = vector.broadcast %c0_i32_20 : i32 to vector<8x1xi32>
    %61 = arith.cmpi eq, %59, %60 : vector<8x1xi32>
    %c7_i32_21 = arith.constant 7 : i32
    %62 = tpu.dynamic_rotate %19 by %c7_i32_21 dim 0 : vector<8x1xf32>, i32 -> vector<8x1xf32>
    %c1_i32_22 = arith.constant 1 : i32
    %63 = tpu.dynamic_rotate %19 by %c1_i32_22 dim 0 : vector<8x1xf32>, i32 -> vector<8x1xf32>
    %64 = arith.select %61, %62, %63 : vector<8x1xi1>, vector<8x1xf32>
    %65 = arith.addf %19, %64 : vector<8x1xf32>
    %cst_23 = arith.constant 0.001953125 : f32
    %66 = vector.broadcast %cst_23 : f32 to vector<8x1xf32>
    %67 = arith.mulf %65, %66 : vector<8x1xf32>
    %68 = arith.mulf %43, %43 : vector<8x1xf32>
    %69 = arith.subf %67, %68 : vector<8x1xf32>
    %cst_24 = arith.constant 0.000000e+00 : f32
    %70 = vector.broadcast %cst_24 : f32 to vector<8x1xf32>
    %71 = arith.maximumf %69, %70 : vector<8x1xf32>
    %cst_25 = arith.constant 9.99999974E-6 : f32
    %72 = vector.broadcast %cst_25 : f32 to vector<8x1xf32>
    %73 = arith.addf %71, %72 : vector<8x1xf32>
    %74 = math.rsqrt %73 : vector<8x1xf32>
    %75 = arith.mulf %74, %1 : vector<8x1xf32>
    %76 = vector.broadcast %43 : vector<8x1xf32> to vector<8x256xf32>
    %77 = arith.subf %14, %76 : vector<8x256xf32>
    %78 = vector.broadcast %75 : vector<8x1xf32> to vector<8x256xf32>
    %79 = arith.mulf %77, %78 : vector<8x256xf32>
    %80 = vector.broadcast %2 : vector<8x1xf32> to vector<8x256xf32>
    %81 = arith.addf %79, %80 : vector<8x256xf32>
    %82 = vector.broadcast %3 : vector<8x1xf32> to vector<8x256xf32>
    %83 = arith.mulf %82, %81 : vector<8x256xf32>
    %84 = arith.negf %83 : vector<8x256xf32>
    %85 = math.exp %84 : vector<8x256xf32>
    %cst_26 = arith.constant 1.000000e+00 : f32
    %86 = vector.broadcast %cst_26 : f32 to vector<8x256xf32>
    %87 = arith.addf %86, %85 : vector<8x256xf32>
    %88 = arith.divf %86, %87 : vector<8x256xf32>
    %cst_27 = arith.constant 5.000000e-01 : f32
    %89 = vector.broadcast %cst_27 : f32 to vector<8x256xf32>
    %90 = arith.cmpf oge, %88, %89 : vector<8x256xf32>
    %cst_28 = arith.constant 0.000000e+00 : f32
    %91 = vector.broadcast %cst_28 : f32 to vector<8x256xf32>
    %92 = arith.select %90, %81, %91 : vector<8x256xi1>, vector<8x256xf32>
    %93 = arith.subf %81, %92 : vector<8x256xf32>
    %c8_i32 = arith.constant 8 : i32
    %c0_i32_29 = arith.constant 0 : i32
    %94 = arith.cmpi eq, %c8_i32, %c0_i32_29 : i32
    %c1_i32_30 = arith.constant 1 : i32
    %95 = arith.select %94, %c1_i32_30, %c8_i32 : i32
    %96 = vector.broadcast %95 : i32 to vector<8x1xi32>
    %97 = arith.remsi %13, %96 : vector<8x1xi32>
    %c0_i32_31 = arith.constant 0 : i32
    %98 = vector.broadcast %c0_i32_31 : i32 to vector<8x1xi32>
    %99 = arith.cmpi ne, %97, %98 : vector<8x1xi32>
    %c0_i32_32 = arith.constant 0 : i32
    %100 = vector.broadcast %c0_i32_32 : i32 to vector<8x1xi32>
    %101 = arith.cmpi slt, %97, %100 : vector<8x1xi32>
    %c0_i32_33 = arith.constant 0 : i32
    %102 = arith.cmpi slt, %95, %c0_i32_33 : i32
    %103 = vector.broadcast %102 : i1 to vector<8x1xi1>
    %104 = vector.broadcast %103 : vector<8x1xi1> to vector<8x1xi1>
    %105 = arith.xori %101, %104 : vector<8x1xi1>
    %106 = arith.andi %105, %99 : vector<8x1xi1>
    %107 = vector.broadcast %95 : i32 to vector<8x1xi32>
    %108 = arith.addi %97, %107 : vector<8x1xi32>
    %109 = arith.select %106, %108, %97 : vector<8x1xi1>, vector<8x1xi32>
    %c4_i32 = arith.constant 4 : i32
    %110 = vector.broadcast %c4_i32 : i32 to vector<8x1xi32>
    %111 = arith.cmpi slt, %109, %110 : vector<8x1xi32>
    %c4_i32_34 = arith.constant 4 : i32
    %112 = tpu.dynamic_rotate %93 by %c4_i32_34 dim 0 : vector<8x256xf32>, i32 -> vector<8x256xf32>
    %c4_i32_35 = arith.constant 4 : i32
    %113 = tpu.dynamic_rotate %93 by %c4_i32_35 dim 0 : vector<8x256xf32>, i32 -> vector<8x256xf32>
    %114 = vector.shape_cast %111 : vector<8x1xi1> to vector<8x1xi1>
    %115 = vector.broadcast %114 : vector<8x1xi1> to vector<8x256xi1>
    %116 = arith.select %115, %112, %113 : vector<8x256xi1>, vector<8x256xf32>
    %117 = arith.addf %92, %116 : vector<8x256xf32>
    %118 = vector.extract_strided_slice %6 {offsets = [0, 0], sizes = [8, 8], strides = [1, 1]} : vector<24x8xf32> to vector<8x8xf32>
    %cst_36 = arith.constant dense<0.000000e+00> : vector<8x256xf32>
    %119 = tpu.matmul %118, %117, %cst_36 {dimension_numbers = #tpu.dot_dimension_numbers<[1], [0], [0], [1], [0, 0, 1, 1], [], []>} : vector<8x8xf32>, vector<8x256xf32>, vector<8x256xf32> -> vector<8x256xf32>
    %120 = vector.extract_strided_slice %6 {offsets = [8, 0], sizes = [8, 8], strides = [1, 1]} : vector<24x8xf32> to vector<8x8xf32>
    %cst_37 = arith.constant dense<0.000000e+00> : vector<8x256xf32>
    %121 = tpu.matmul %120, %117, %cst_37 {dimension_numbers = #tpu.dot_dimension_numbers<[1], [0], [0], [1], [0, 0, 1, 1], [], []>} : vector<8x8xf32>, vector<8x256xf32>, vector<8x256xf32> -> vector<8x256xf32>
    %122 = vector.extract_strided_slice %6 {offsets = [16, 0], sizes = [8, 8], strides = [1, 1]} : vector<24x8xf32> to vector<8x8xf32>
    %cst_38 = arith.constant dense<0.000000e+00> : vector<8x256xf32>
    %123 = tpu.matmul %122, %117, %cst_38 {dimension_numbers = #tpu.dot_dimension_numbers<[1], [0], [0], [1], [0, 0, 1, 1], [], []>} : vector<8x8xf32>, vector<8x256xf32>, vector<8x256xf32> -> vector<8x256xf32>
    %124 = vector.broadcast %4 : vector<8x1xf32> to vector<8x256xf32>
    %125 = arith.addf %123, %124 : vector<8x256xf32>
    %c1_i32_39 = arith.constant 1 : i32
    %126 = tpu.dynamic_rotate %119 by %c1_i32_39 dim 1 : vector<8x256xf32>, i32 -> vector<8x256xf32>
    %127 = vector.broadcast %9 : vector<1x256xf32> to vector<8x256xf32>
    %128 = arith.mulf %126, %127 : vector<8x256xf32>
    %c255_i32 = arith.constant 255 : i32
    %129 = tpu.dynamic_rotate %119 by %c255_i32 dim 1 : vector<8x256xf32>, i32 -> vector<8x256xf32>
    %130 = vector.broadcast %10 : vector<1x256xf32> to vector<8x256xf32>
    %131 = arith.mulf %129, %130 : vector<8x256xf32>
    %132 = vector.extract_strided_slice %5 {offsets = [0, 0], sizes = [8, 1], strides = [1, 1]} : vector<8x9xf32> to vector<8x1xf32>
    %133 = vector.broadcast %132 : vector<8x1xf32> to vector<8x256xf32>
    %134 = arith.mulf %133, %128 : vector<8x256xf32>
    %135 = vector.extract_strided_slice %5 {offsets = [0, 1], sizes = [8, 1], strides = [1, 1]} : vector<8x9xf32> to vector<8x1xf32>
    %136 = vector.broadcast %135 : vector<8x1xf32> to vector<8x256xf32>
    %137 = arith.mulf %136, %119 : vector<8x256xf32>
    %138 = arith.addf %134, %137 : vector<8x256xf32>
    %139 = vector.extract_strided_slice %5 {offsets = [0, 2], sizes = [8, 1], strides = [1, 1]} : vector<8x9xf32> to vector<8x1xf32>
    %140 = vector.broadcast %139 : vector<8x1xf32> to vector<8x256xf32>
    %141 = arith.mulf %140, %131 : vector<8x256xf32>
    %142 = arith.addf %138, %141 : vector<8x256xf32>
    %143 = vector.extract_strided_slice %5 {offsets = [0, 3], sizes = [8, 1], strides = [1, 1]} : vector<8x9xf32> to vector<8x1xf32>
    %144 = vector.broadcast %143 : vector<8x1xf32> to vector<8x256xf32>
    %145 = arith.mulf %144, %128 : vector<8x256xf32>
    %146 = vector.extract_strided_slice %5 {offsets = [0, 4], sizes = [8, 1], strides = [1, 1]} : vector<8x9xf32> to vector<8x1xf32>
    %147 = vector.broadcast %146 : vector<8x1xf32> to vector<8x256xf32>
    %148 = arith.mulf %147, %119 : vector<8x256xf32>
    %149 = arith.addf %145, %148 : vector<8x256xf32>
    %150 = vector.extract_strided_slice %5 {offsets = [0, 5], sizes = [8, 1], strides = [1, 1]} : vector<8x9xf32> to vector<8x1xf32>
    %151 = vector.broadcast %150 : vector<8x1xf32> to vector<8x256xf32>
    %152 = arith.mulf %151, %131 : vector<8x256xf32>
    %153 = arith.addf %149, %152 : vector<8x256xf32>
    %154 = vector.extract_strided_slice %5 {offsets = [0, 6], sizes = [8, 1], strides = [1, 1]} : vector<8x9xf32> to vector<8x1xf32>
    %155 = vector.broadcast %154 : vector<8x1xf32> to vector<8x256xf32>
    %156 = arith.mulf %155, %128 : vector<8x256xf32>
    %157 = vector.extract_strided_slice %5 {offsets = [0, 7], sizes = [8, 1], strides = [1, 1]} : vector<8x9xf32> to vector<8x1xf32>
    %158 = vector.broadcast %157 : vector<8x1xf32> to vector<8x256xf32>
    %159 = arith.mulf %158, %119 : vector<8x256xf32>
    %160 = arith.addf %156, %159 : vector<8x256xf32>
    %161 = vector.extract_strided_slice %5 {offsets = [0, 8], sizes = [8, 1], strides = [1, 1]} : vector<8x9xf32> to vector<8x1xf32>
    %162 = vector.broadcast %161 : vector<8x1xf32> to vector<8x256xf32>
    %163 = arith.mulf %162, %131 : vector<8x256xf32>
    %164 = arith.addf %160, %163 : vector<8x256xf32>
    %165 = arith.addf %125, %153 : vector<8x256xf32>
    %c16_i32 = arith.constant 16 : i32
    %166 = tpu.dynamic_rotate %142 by %c16_i32 dim 1 : vector<8x256xf32>, i32 -> vector<8x256xf32>
    %167 = vector.broadcast %11 : vector<1x256xf32> to vector<8x256xf32>
    %168 = arith.mulf %166, %167 : vector<8x256xf32>
    %169 = arith.addf %165, %168 : vector<8x256xf32>
    %c240_i32 = arith.constant 240 : i32
    %170 = tpu.dynamic_rotate %164 by %c240_i32 dim 1 : vector<8x256xf32>, i32 -> vector<8x256xf32>
    %171 = vector.broadcast %12 : vector<1x256xf32> to vector<8x256xf32>
    %172 = arith.mulf %170, %171 : vector<8x256xf32>
    %173 = arith.addf %169, %172 : vector<8x256xf32>
    %cst_40 = arith.constant dense<0.000000e+00> : vector<8xf32>
    %174 = vector.multi_reduction <add>, %173, %cst_40 [1] : vector<8x256xf32> to vector<8xf32>
    %175 = vector.shape_cast %174 : vector<8xf32> to vector<8x1xf32>
    %cst_41 = arith.constant 3.906250e-03 : f32
    %176 = vector.broadcast %cst_41 : f32 to vector<8x1xf32>
    %177 = arith.mulf %175, %176 : vector<8x1xf32>
    %cst_42 = arith.constant dense<0.000000e+00> : vector<8xf32>
    %178 = vector.multi_reduction <add>, %121, %cst_42 [1] : vector<8x256xf32> to vector<8xf32>
    %179 = vector.shape_cast %178 : vector<8xf32> to vector<8x1xf32>
    %cst_43 = arith.constant 3.906250e-03 : f32
    %180 = vector.broadcast %cst_43 : f32 to vector<8x1xf32>
    %181 = arith.mulf %179, %180 : vector<8x1xf32>
    %182 = arith.maximumf %177, %181 : vector<8x1xf32>
    %c1_i32_44 = arith.constant 1 : i32
    %183 = vector.broadcast %c1_i32_44 : i32 to vector<8x1xi32>
    %184 = arith.andi %13, %183 : vector<8x1xi32>
    %c0_i32_45 = arith.constant 0 : i32
    %185 = vector.broadcast %c0_i32_45 : i32 to vector<8x1xi32>
    %186 = arith.cmpi eq, %184, %185 : vector<8x1xi32>
    %c7_i32_46 = arith.constant 7 : i32
    %187 = tpu.dynamic_rotate %182 by %c7_i32_46 dim 0 : vector<8x1xf32>, i32 -> vector<8x1xf32>
    %c1_i32_47 = arith.constant 1 : i32
    %188 = tpu.dynamic_rotate %182 by %c1_i32_47 dim 0 : vector<8x1xf32>, i32 -> vector<8x1xf32>
    %189 = arith.select %186, %187, %188 : vector<8x1xi1>, vector<8x1xf32>
    %190 = arith.maximumf %182, %189 : vector<8x1xf32>
    %c2_i32_48 = arith.constant 2 : i32
    %191 = vector.broadcast %c2_i32_48 : i32 to vector<8x1xi32>
    %192 = arith.andi %13, %191 : vector<8x1xi32>
    %c0_i32_49 = arith.constant 0 : i32
    %193 = vector.broadcast %c0_i32_49 : i32 to vector<8x1xi32>
    %194 = arith.cmpi eq, %192, %193 : vector<8x1xi32>
    %c6_i32 = arith.constant 6 : i32
    %195 = tpu.dynamic_rotate %190 by %c6_i32 dim 0 : vector<8x1xf32>, i32 -> vector<8x1xf32>
    %c2_i32_50 = arith.constant 2 : i32
    %196 = tpu.dynamic_rotate %190 by %c2_i32_50 dim 0 : vector<8x1xf32>, i32 -> vector<8x1xf32>
    %197 = arith.select %194, %195, %196 : vector<8x1xi1>, vector<8x1xf32>
    %198 = arith.maximumf %190, %197 : vector<8x1xf32>
    %c4_i32_51 = arith.constant 4 : i32
    %199 = vector.broadcast %c4_i32_51 : i32 to vector<8x1xi32>
    %200 = arith.andi %13, %199 : vector<8x1xi32>
    %c0_i32_52 = arith.constant 0 : i32
    %201 = vector.broadcast %c0_i32_52 : i32 to vector<8x1xi32>
    %202 = arith.cmpi eq, %200, %201 : vector<8x1xi32>
    %c4_i32_53 = arith.constant 4 : i32
    %203 = tpu.dynamic_rotate %198 by %c4_i32_53 dim 0 : vector<8x1xf32>, i32 -> vector<8x1xf32>
    %c4_i32_54 = arith.constant 4 : i32
    %204 = tpu.dynamic_rotate %198 by %c4_i32_54 dim 0 : vector<8x1xf32>, i32 -> vector<8x1xf32>
    %205 = arith.select %202, %203, %204 : vector<8x1xi1>, vector<8x1xf32>
    %206 = arith.maximumf %198, %205 : vector<8x1xf32>
    %207 = arith.subf %177, %206 : vector<8x1xf32>
    %208 = math.exp %207 : vector<8x1xf32>
    %209 = arith.subf %181, %206 : vector<8x1xf32>
    %210 = math.exp %209 : vector<8x1xf32>
    %211 = arith.addf %208, %210 : vector<8x1xf32>
    %c1_i32_55 = arith.constant 1 : i32
    %212 = vector.broadcast %c1_i32_55 : i32 to vector<8x1xi32>
    %213 = arith.andi %13, %212 : vector<8x1xi32>
    %c0_i32_56 = arith.constant 0 : i32
    %214 = vector.broadcast %c0_i32_56 : i32 to vector<8x1xi32>
    %215 = arith.cmpi eq, %213, %214 : vector<8x1xi32>
    %c7_i32_57 = arith.constant 7 : i32
    %216 = tpu.dynamic_rotate %211 by %c7_i32_57 dim 0 : vector<8x1xf32>, i32 -> vector<8x1xf32>
    %c1_i32_58 = arith.constant 1 : i32
    %217 = tpu.dynamic_rotate %211 by %c1_i32_58 dim 0 : vector<8x1xf32>, i32 -> vector<8x1xf32>
    %218 = arith.select %215, %216, %217 : vector<8x1xi1>, vector<8x1xf32>
    %219 = arith.addf %211, %218 : vector<8x1xf32>
    %c2_i32_59 = arith.constant 2 : i32
    %220 = vector.broadcast %c2_i32_59 : i32 to vector<8x1xi32>
    %221 = arith.andi %13, %220 : vector<8x1xi32>
    %c0_i32_60 = arith.constant 0 : i32
    %222 = vector.broadcast %c0_i32_60 : i32 to vector<8x1xi32>
    %223 = arith.cmpi eq, %221, %222 : vector<8x1xi32>
    %c6_i32_61 = arith.constant 6 : i32
    %224 = tpu.dynamic_rotate %219 by %c6_i32_61 dim 0 : vector<8x1xf32>, i32 -> vector<8x1xf32>
    %c2_i32_62 = arith.constant 2 : i32
    %225 = tpu.dynamic_rotate %219 by %c2_i32_62 dim 0 : vector<8x1xf32>, i32 -> vector<8x1xf32>
    %226 = arith.select %223, %224, %225 : vector<8x1xi1>, vector<8x1xf32>
    %227 = arith.addf %219, %226 : vector<8x1xf32>
    %c4_i32_63 = arith.constant 4 : i32
    %228 = vector.broadcast %c4_i32_63 : i32 to vector<8x1xi32>
    %229 = arith.andi %13, %228 : vector<8x1xi32>
    %c0_i32_64 = arith.constant 0 : i32
    %230 = vector.broadcast %c0_i32_64 : i32 to vector<8x1xi32>
    %231 = arith.cmpi eq, %229, %230 : vector<8x1xi32>
    %c4_i32_65 = arith.constant 4 : i32
    %232 = tpu.dynamic_rotate %227 by %c4_i32_65 dim 0 : vector<8x1xf32>, i32 -> vector<8x1xf32>
    %c4_i32_66 = arith.constant 4 : i32
    %233 = tpu.dynamic_rotate %227 by %c4_i32_66 dim 0 : vector<8x1xf32>, i32 -> vector<8x1xf32>
    %234 = arith.select %231, %232, %233 : vector<8x1xi1>, vector<8x1xf32>
    %235 = arith.addf %227, %234 : vector<8x1xf32>
    %236 = arith.divf %208, %235 : vector<8x1xf32>
    %237 = arith.divf %210, %235 : vector<8x1xf32>
    %238 = vector.broadcast %236 : vector<8x1xf32> to vector<8x256xf32>
    %239 = arith.mulf %173, %238 : vector<8x256xf32>
    %240 = vector.broadcast %237 : vector<8x1xf32> to vector<8x256xf32>
    %241 = arith.mulf %121, %240 : vector<8x256xf32>
    %242 = arith.addf %239, %241 : vector<8x256xf32>
    %c0_67 = arith.constant 0 : index
    %c0_68 = arith.constant 0 : index
    %243 = vector.load %arg5[%c0_67, %c0_68] : memref<8x256xf32, #tpu.memory_space<vmem>>, vector<8x256xf32>
    tpu.vector_store %arg5[%c0_67, %c0_68], %242 {strides = array<i32>} : memref<8x256xf32, #tpu.memory_space<vmem>>, vector<8x256xf32>,
    return
  }
  func.func @transform_0(%arg0: i32) -> (i32, i32) {
    %c0_i32 = arith.constant 0 : i32
    %c0_i32_0 = arith.constant 0 : i32
    return %arg0, %c0_i32 : i32, i32
  }
  func.func @transform_1(%arg0: i32) -> (i32, i32) {
    %c0_i32 = arith.constant 0 : i32
    %c0_i32_0 = arith.constant 0 : i32
    %c0_i32_1 = arith.constant 0 : i32
    return %c0_i32, %c0_i32_0 : i32, i32
  }
  func.func @transform_2(%arg0: i32) -> (i32, i32) {
    %c0_i32 = arith.constant 0 : i32
    %c0_i32_0 = arith.constant 0 : i32
    %c0_i32_1 = arith.constant 0 : i32
    return %c0_i32, %c0_i32_0 : i32, i32
  }
  func.func @transform_3(%arg0: i32) -> (i32, i32) {
    %c0_i32 = arith.constant 0 : i32
    %c0_i32_0 = arith.constant 0 : i32
    %c0_i32_1 = arith.constant 0 : i32
    return %c0_i32, %c0_i32_0 : i32, i32
  }
  func.func @transform_4(%arg0: i32) -> (i32, i32) {
    %c0_i32 = arith.constant 0 : i32
    %c0_i32_0 = arith.constant 0 : i32
    return %arg0, %c0_i32 : i32, i32
  }
}

</mosaic_0001>

<llo_original>
// kernel: tpu_custom_call.1
$region0: #{tpu_custom_call.1}
  #allocation0 [shape = 'u32[]', space=smem, size = 0x4, offset = 0x4, fixed_abs, tag = 'smem constant byte address 0x4 - core index']
  #allocation1 [shape = 'u32[72,128]{1,0:T(1,128)}', space=vmem, size = 0x9000, scoped, tag = 'internal scratch']
  %s0 = inlined_call_operand.vmem [shape: f32[16,256], index: 0, kind: input, shape index: {}]
  %s1 = inlined_call_operand.hbm [shape: f32[8,13], index: 1, kind: input, shape index: {}]
  %s2 = inlined_call_operand.vmem [shape: f32[24,8], index: 2, kind: input, shape index: {}]
  %s3 = inlined_call_operand.hbm [shape: bf16[5,256], index: 3, kind: input, shape index: {}]
  %s4 = inlined_call_operand.hbm [shape: f32[16,256], index: 4, kind: output, shape index: {}]
  %s5 = sld [smem:[#allocation0]]
  $region57: #{tpu_custom_call.1} parent=0
    _
  %s7 = ssub.s32 1, %s5
  %s8 = scalar_select 0, %s7, %s5
  $region1: #{tpu_custom_call.1} parent=0
    #allocation2 [shape = 'u8[4096]{0}', space=vmem, size = 0x1000, scoped, tag = 'input window, operand 1, single buffered']
    #allocation3 [shape = 's32[2]{0}', space=sflag, size = 0x8, scoped, tag = 'scoped memory for tpu_custom_call.1']
    #allocation4 [shape = 's32[2]{0}', space=sflag, size = 0x8, scoped, tag = 'scoped memory for tpu_custom_call.1']
    #allocation5 [shape = 'u8[4096]{0}', space=vmem, size = 0x1000, scoped, tag = 'input window, operand 3, single buffered']
    #allocation6 [shape = 's32[1]{0}', space=sflag, size = 0x4, scoped, tag = 'scoped memory for tpu_custom_call.1']
    #allocation7 [shape = 'u8[16384]{0}', space=vmem, size = 0x4000, scoped, tag = 'output window, operand 0']
    %9 = vsyncpa [#allocation3], 0
    %10 = vsyncpa [#allocation6], 0
    %11 = vsyncpa [#allocation4], 0
    %s12 = scalar_lea.sflag [#allocation4], 1
    %13 = vsyncpa %s12, 0
    loop: start=0, step=1, limit=4
    $region2: #{tpu_custom_call.1} parent=1 // loop_pre_header
      _
    $region3: #{tpu_custom_call.1} parent=1 // loop_header
      %s15 = sphi 0, %s19
      %p16 = scmp.ge.s32.totalorder %s15, 4
      %s25 = sphi 0, %s27
      %s28 = sphi 0, %s25
      %s29 = sphi 0, %s28
      %s45 = sphi 0, %s29
      %s49 = sphi 0, %s49
      %s51 = sphi 0, %s49
      %s52 = sphi 0, %s51
      %s66 = sphi 0, %s52
      %s70 = sphi 0, %s70
      %s72 = sphi 0, %s70
      %s73 = sphi 0, %s72
      %s87 = sphi 0, %s73
      %s91 = sphi 0, %s91
      %s93 = sphi 0, %s91
      %s94 = sphi 0, %s93
      %s108 = sphi 0, %s94
      %s114 = sphi 0, %s116
      %s117 = sphi 0, %s114
      %s118 = sphi 0, %s117
      %s134 = sphi 0, %s118
    $region4: #{tpu_custom_call.1} parent=1 // loop_header_branch
      %18 = sbr.rel (%p16) target = $region8
    $region5: #{tpu_custom_call.1} parent=1 // loop_body
      %s20 = ssub.s32 %s15, 1
      %s21 = ssub.s32 %s15, 2
      %s22 = sadd.s32 %s15, 1
      %s23 = ssub.s32 %s15, %s22
      %p24 = scmp.eq.s32.totalorder %s23, 0
      %s26 = sadd.s32 %s25, 1
      %s27 = scalar_select %p24, %s25, %s26
      %p30 = pneg %p24
      %p31 = scmp.eq.s32.totalorder %s15, 1
      %p32 = por %p30, %p31
      %p33 = scmp.ne.s32.totalorder %s25, %s28
      %p34 = scmp.eq.s32.totalorder %s15, 0
      %p35 = por %p33, %p34
      %p36 = scmp.ne.s32.totalorder %s25, %s28
      %p37 = scmp.eq.s32.totalorder %s20, 1
      %p38 = por %p36, %p37
      %p39 = scmp.ne.s32.totalorder %s28, %s29
      %p40 = scmp.eq.s32.totalorder %s20, 0
      %p41 = por %p39, %p40
      %p42 = scmp.ne.s32.totalorder %s28, %s29
      %p43 = scmp.eq.s32.totalorder %s21, 1
      %p44 = por %p42, %p43
      %p46 = scmp.ne.s32.totalorder %s29, %s45
      %p47 = scmp.eq.s32.totalorder %s21, 0
      %p48 = por %p46, %p47
      %s50 = sadd.s32 %s49, 1
      %p53 = scmp.eq.s32.totalorder %s15, 1
      %p54 = scmp.ne.s32.totalorder %s49, %s51
      %p55 = scmp.eq.s32.totalorder %s15, 0
      %p56 = por %p54, %p55
      %p57 = scmp.ne.s32.totalorder %s49, %s51
      %p58 = scmp.eq.s32.totalorder %s20, 1
      %p59 = por %p57, %p58
      %p60 = scmp.ne.s32.totalorder %s51, %s52
      %p61 = scmp.eq.s32.totalorder %s20, 0
      %p62 = por %p60, %p61
      %p63 = scmp.ne.s32.totalorder %s51, %s52
      %p64 = scmp.eq.s32.totalorder %s21, 1
      %p65 = por %p63, %p64
      %p67 = scmp.ne.s32.totalorder %s52, %s66
      %p68 = scmp.eq.s32.totalorder %s21, 0
      %p69 = por %p67, %p68
      %s71 = sadd.s32 %s70, 1
      %p74 = scmp.eq.s32.totalorder %s15, 1
      %p75 = scmp.ne.s32.totalorder %s70, %s72
      %p76 = scmp.eq.s32.totalorder %s15, 0
      %p77 = por %p75, %p76
      %p78 = scmp.ne.s32.totalorder %s70, %s72
      %p79 = scmp.eq.s32.totalorder %s20, 1
      %p80 = por %p78, %p79
      %p81 = scmp.ne.s32.totalorder %s72, %s73
      %p82 = scmp.eq.s32.totalorder %s20, 0
      %p83 = por %p81, %p82
      %p84 = scmp.ne.s32.totalorder %s72, %s73
      %p85 = scmp.eq.s32.totalorder %s21, 1
      %p86 = por %p84, %p85
      %p88 = scmp.ne.s32.totalorder %s73, %s87
      %p89 = scmp.eq.s32.totalorder %s21, 0
      %p90 = por %p88, %p89
      %s92 = sadd.s32 %s91, 1
      %p95 = scmp.eq.s32.totalorder %s15, 1
      %p96 = scmp.ne.s32.totalorder %s91, %s93
      %p97 = scmp.eq.s32.totalorder %s15, 0
      %p98 = por %p96, %p97
      %p99 = scmp.ne.s32.totalorder %s91, %s93
      %p100 = scmp.eq.s32.totalorder %s20, 1
      %p101 = por %p99, %p100
      %p102 = scmp.ne.s32.totalorder %s93, %s94
      %p103 = scmp.eq.s32.totalorder %s20, 0
      %p104 = por %p102, %p103
      %p105 = scmp.ne.s32.totalorder %s93, %s94
      %p106 = scmp.eq.s32.totalorder %s21, 1
      %p107 = por %p105, %p106
      %p109 = scmp.ne.s32.totalorder %s94, %s108
      %p110 = scmp.eq.s32.totalorder %s21, 0
      %p111 = por %p109, %p110
      %s112 = ssub.s32 %s15, %s22
      %p113 = scmp.eq.s32.totalorder %s112, 0
      %s115 = sadd.s32 %s114, 1
      %s116 = scalar_select %p113, %s114, %s115
      %p119 = pneg %p113
      %p120 = scmp.eq.s32.totalorder %s15, 1
      %p121 = por %p119, %p120
      %p122 = scmp.ne.s32.totalorder %s114, %s117
      %p123 = scmp.eq.s32.totalorder %s15, 0
      %p124 = por %p122, %p123
      %p125 = scmp.ne.s32.totalorder %s114, %s117
      %p126 = scmp.eq.s32.totalorder %s20, 1
      %p127 = por %p125, %p126
      %p128 = scmp.ne.s32.totalorder %s117, %s118
      %p129 = scmp.eq.s32.totalorder %s20, 0
      %p130 = por %p128, %p129
      %p131 = scmp.ne.s32.totalorder %s117, %s118
      %p132 = scmp.eq.s32.totalorder %s21, 1
      %p133 = por %p131, %p132
      %p135 = scmp.ne.s32.totalorder %s118, %s134
      %p136 = scmp.eq.s32.totalorder %s21, 0
      %p137 = por %p135, %p136
      %p138 = scmp.le.s32.totalorder 1, %s15
      %p139 = scmp.lt.s32.totalorder %s15, 3
      %p140 = pnand %p138, %p139
      %p141 = pneg %p140
      // Predicated region
      $region9: #{tpu_custom_call.1} parent=5 // pred_check
        _
      $region10: #{tpu_custom_call.1} parent=5 // pred_check_branch
        %143 = sbr.rel (%p140) target = $region12
      $region11: #{tpu_custom_call.1} parent=5 // pred_region
        %s144 = ssub.s32 %s15, 1
        // Predicated region
        $region13: #{tpu_custom_call.1} parent=11 // pred_check
          %p145 = pneg %p62
        $region14: #{tpu_custom_call.1} parent=11 // pred_check_branch
          %147 = sbr.rel (%p145) target = $region16
        $region15: #{tpu_custom_call.1} parent=11 // pred_region
          %149 = vsyncadd [#allocation3], 0
          %s151 = sshll.u32 %s1, 4
          %s152 = int_to_ptr.hbm [resolvable:$true] %s151
          %s153 = sshll.u32 [#allocation2], 4
          %s154 = int_to_ptr.vmem [resolvable:$true] %s153
          %156 = dma.hbm_to_vmem [thread:$0]  %s152, 128, %s154, [#allocation3]
        $region16: #{tpu_custom_call.1} parent=11 // pred_fallthru
          _
        // Predicated region
        $region17: #{tpu_custom_call.1} parent=11 // pred_check
          %p157 = pneg %p83
        $region18: #{tpu_custom_call.1} parent=11 // pred_check_branch
          %159 = sbr.rel (%p157) target = $region20
        $region19: #{tpu_custom_call.1} parent=11 // pred_region
          _
        $region20: #{tpu_custom_call.1} parent=11 // pred_fallthru
          _
        // Predicated region
        $region21: #{tpu_custom_call.1} parent=11 // pred_check
          %p160 = pneg %p104
        $region22: #{tpu_custom_call.1} parent=11 // pred_check_branch
          %162 = sbr.rel (%p160) target = $region24
        $region23: #{tpu_custom_call.1} parent=11 // pred_region
          %164 = vsyncadd [#allocation6], 0
          %s166 = sshll.u32 %s3, 4
          %s167 = int_to_ptr.hbm [resolvable:$true] %s166
          %s168 = sshll.u32 [#allocation5], 4
          %s169 = int_to_ptr.vmem [resolvable:$true] %s168
          %171 = dma.hbm_to_vmem [thread:$0]  %s167, 128, %s169, [#allocation6]
        $region24: #{tpu_custom_call.1} parent=11 // pred_fallthru
          _
      $region12: #{tpu_custom_call.1} parent=5 // pred_fallthru
        _
      %p172 = scmp.lt.s32.totalorder %s15, 2
      // Predicated region
      $region25: #{tpu_custom_call.1} parent=5 // pred_check
        %p173 = pneg %p172
      $region26: #{tpu_custom_call.1} parent=5 // pred_check_branch
        %175 = sbr.rel (%p173) target = $region28
      $region27: #{tpu_custom_call.1} parent=5 // pred_region
        // Predicated region
        $region29: #{tpu_custom_call.1} parent=27 // pred_check
          %p176 = pneg %p35
        $region30: #{tpu_custom_call.1} parent=27 // pred_check_branch
          %178 = sbr.rel (%p176) target = $region32
        $region31: #{tpu_custom_call.1} parent=27 // pred_region
          %p179 = scmp.lt.s32.totalorder %s15, 1
          %s180 = scalar_select %p179, %s15, 1
          %s181 = smul.addr %s180, 2
          %s182 = smul.addr %s181, 8
          %s183 = scalar_lea.vmem %s0, %s182
        $region32: #{tpu_custom_call.1} parent=27 // pred_fallthru
          _
      $region28: #{tpu_custom_call.1} parent=5 // pred_fallthru
        _
      %p184 = scmp.le.s32.totalorder 1, %s15
      %p185 = scmp.lt.s32.totalorder %s15, 3
      %p186 = pnand %p184, %p185
      %p187 = pneg %p186
      // Predicated region
      $region33: #{tpu_custom_call.1} parent=5 // pred_check
        _
      $region34: #{tpu_custom_call.1} parent=5 // pred_check_branch
        %189 = sbr.rel (%p186) target = $region36
      $region35: #{tpu_custom_call.1} parent=5 // pred_region
        %s190 = ssub.s32 %s15, 1
        // Predicated region
        $region37: #{tpu_custom_call.1} parent=35 // pred_check
          %p191 = pneg %p62
        $region38: #{tpu_custom_call.1} parent=35 // pred_check_branch
          %193 = sbr.rel (%p191) target = $region40
        $region39: #{tpu_custom_call.1} parent=35 // pred_region
          %195 = dma.done [#allocation3], 128
        $region40: #{tpu_custom_call.1} parent=35 // pred_fallthru
          _
        // Predicated region
        $region41: #{tpu_custom_call.1} parent=35 // pred_check
          %p196 = pneg %p104
        $region42: #{tpu_custom_call.1} parent=35 // pred_check_branch
          %198 = sbr.rel (%p196) target = $region44
        $region43: #{tpu_custom_call.1} parent=35 // pred_region
          %200 = dma.done [#allocation6], 128
        $region44: #{tpu_custom_call.1} parent=35 // pred_fallthru
          _
        %p201 = scmp.lt.s32.totalorder %s20, 1
        %s202 = scalar_select %p201, %s20, 1
        %s203 = smul.addr %s202, 2
        %s204 = smul.addr %s203, 8
        %s205 = scalar_lea.vmem %s0, %s204
        %p206 = pneg %p41
        %p207 = pneg %p38
        %p208 = pneg %p62
        %p209 = pneg %p59
        %p210 = pneg %p83
        %p211 = pneg %p80
        %p212 = pneg %p104
        %p213 = pneg %p101
        %p214 = pneg %p130
        %p215 = pneg %p127
        %s216 = sand.u32 %s117, 1
        %s217 = scalar_lea.sflag [#allocation4], %s216
        %s218 = sand.u32 %s117, 1
        %s219 = smul.addr %s218, 16
        %s220 = scalar_lea.vmem [#allocation7], %s219
        %p221 = scmp.lt.s32.totalorder %s20, 1
        %s222 = scalar_select %p221, %s20, 1
        %s223 = smul.addr %s222, 2
        %s224 = smul.addr %s223, 8
        %s225 = scalar_lea.vmem %s0, %s224
        %v226 = vld [vmem:[#allocation2] sm:$0xff]
        %v227 = vld [vmem:[%s2] sm:$0xff]
        %v228 = vld [vmem:[%s2 + $0x8] sm:$0xff]
        %v229 = vld [vmem:[%s2 + $0x10] sm:$0xff]
        %v230 = vld [vmem:[#allocation5] sm:$0x77]
        %v231 = vunpack.c.l.bf16 %v230
        %v232 = vunpack.c.h.bf16 %v230
        %v233 = vlaneseq
        %v234 = vshrl.u32 %v233, 7
        %v235 = vld [vmem:[%s225] sm:$0xff]
        %v236 = vld [vmem:[%s225 + $0x8] sm:$0xff]
        %v237 = vadd.f32 %v235, %v236
        %238 = vadd.xlane.f32.xlu0 %v237
        %v239 = vpop.xlane.xlu0 %238
        %v240 = vmul.f32 %v235, %v235
        %v241 = vmul.f32 %v236, %v236
        %v242 = vadd.f32 %v240, %v241
        %243 = vadd.xlane.f32.xlu0 %v242
        %v244 = vpop.xlane.xlu0 %243
        %vm245 = vcmp.lt.s32.totalorder %v234, 0
        %v246 = vsub.s32 0, %v234
        %v247 = vsel %vm245, %v246, %v234
        %v248 = vshrl.u32 %v247, 1
        %v249 = vand.u32 %v247, 1
        %v250 = vsub.s32 0, %v249
        %v251 = vsel %vm245, %v250, %v249
        %vm252 = vcmp.ne.s32.totalorder %v251, 0
        %vm253 = vcmp.lt.s32.totalorder %v251, 0
        %vm254 = vmand %vm253, %vm252
        %v255 = vadd.s32 %v251, 2
        %v256 = vsel %vm254, %v255, %v251
        %vm257 = vcmp.eq.s32.totalorder %v256, 0
        %v258 = vrot.slane %v239, 1
        %v259 = vrot.slane %v239, 7
        %v260 = vsel %vm257, %v258, %v259
        %v261 = vadd.f32 %v239, %v260
        %v262 = vmul.f32 %v261, 0.001953125
        %v263 = vrot.slane %v244, 1
        %v264 = vrot.slane %v244, 7
        %v265 = vsel %vm257, %v263, %v264
        %v266 = vadd.f32 %v244, %v265
        %v267 = vmul.f32 %v266, 0.001953125
        %v268 = vmul.f32 %v262, %v262
        %v269 = vsub.f32 %v267, %v268
        %v270 = vmax.f32 %v269, 0.0
        %v271 = vadd.f32 %v270, 1e-05
        %v272 = vrsqrt.pop %v271
        %v273 = vmul.f32 %v272, %v271
        %v274 = vmul.f32 %v273, %v272
        %v275 = vmul.f32 0.5, %v274
        %v276 = vsub.f32 1.5, %v275
        %v277 = vmul.f32 %v272, %v276
        %vm278 = vweird.f32 %v271
        %vm279 = vweird.f32 %v272
        %vm280 = vmor %vm278, %vm279
        %v281 = vsel %vm280, %v272, %v277
        %v282 = vmul.f32 %v281, %v226
        %284 = vset.pattern.permute.xlu0 0
        %285 = vperm.xlu0 %284, %v262
        %v286 = vpop.permute.xlu0 %285
        %v288 = vsub.f32 %v235, %v286
        %v289 = vsub.f32 %v236, %v286
        %291 = vset.pattern.permute.xlu0 0
        %292 = vperm.xlu0 %291, %v282
        %v293 = vpop.permute.xlu0 %292
        %v295 = vmul.f32 %v288, %v293
        %v296 = vmul.f32 %v289, %v293
        %298 = vset.pattern.permute.xlu0 1
        %299 = vperm.xlu0 %298, %v226
        %v300 = vpop.permute.xlu0 %299
        %v302 = vadd.f32 %v295, %v300
        %v303 = vadd.f32 %v296, %v300
        %304 = vset.pattern.permute.xlu0 2
        %305 = vperm.xlu0 %304, %v226
        %v306 = vpop.permute.xlu0 %305
        %v308 = vmul.f32 %v306, %v302
        %v309 = vmul.f32 %v306, %v303
        %v310 = vxor.u32 %v308, 2147483648
        %v311 = vxor.u32 %v309, 2147483648
        %v312 = vmul.f32 %v310, 1.442695
        %v313 = vpow.pop %v312
        %v314 = vmul.f32 %v311, 1.442695
        %v315 = vpow.pop %v314
        %v316 = vadd.f32 %v313, 1.0
        %v317 = vadd.f32 %v315, 1.0
        %v318 = vrcp.pop %v316
        %v319 = vmul.f32 %v316, %v318
        %v320 = vsub.f32 1.0, %v319
        %v321 = vmul.f32 %v318, %v320
        %v322 = vadd.f32 %v318, %v321
        %vm323 = vweird.f32 %v316
        %vm324 = vweird.f32 %v318
        %vm325 = vmor %vm323, %vm324
        %v326 = vsel %vm325, %v318, %v322
        %v327 = vand.u32 2147483647, %v316
        %vm328 = vcmp.eq.f32.partialorder %v327, 8.507059e+37
        %v329 = vand.u32 %v316, 2147483648
        %v330 = vor.u32 1.1754944e-38, %v329
        %v331 = vsel %vm328, %v330, %v326
        %v332 = vmul.f32 1.0, %v331
        %v333 = vrcp.pop %v317
        %v334 = vmul.f32 %v317, %v333
        %v335 = vsub.f32 1.0, %v334
        %v336 = vmul.f32 %v333, %v335
        %v337 = vadd.f32 %v333, %v336
        %vm338 = vweird.f32 %v317
        %vm339 = vweird.f32 %v333
        %vm340 = vmor %vm338, %vm339
        %v341 = vsel %vm340, %v333, %v337
        %v342 = vand.u32 2147483647, %v317
        %vm343 = vcmp.eq.f32.partialorder %v342, 8.507059e+37
        %v344 = vand.u32 %v317, 2147483648
        %v345 = vor.u32 1.1754944e-38, %v344
        %v346 = vsel %vm343, %v345, %v341
        %v347 = vmul.f32 1.0, %v346
        %vm348 = vcmp.ge.f32.partialorder %v332, 0.5
        %vm349 = vcmp.ge.f32.partialorder %v347, 0.5
        %v350 = vsel %vm348, %v302, 0.0
        %v351 = vsel %vm349, %v303, 0.0
        %v352 = vsub.f32 %v302, %v350
        %v353 = vsub.f32 %v303, %v351
        %v354 = vrot.slane %v352, 4
        %v355 = vrot.slane %v353, 4
        %v356 = vadd.f32 %v350, %v354
        %v357 = vadd.f32 %v351, %v355
        %vm358 = vcmask 64512
        %v360 = vsel %vm358, %v227, 0
        %362 = vmatpush.msra.mxu0 0.0
        %363 = vmatpush.msra.mxu0 0.0
        %364 = vmatpush.msra.mxu0 0.0
        %365 = vmatpush.msra.mxu0 0.0
        %366 = vmatpush.msra.mxu0 0.0
        %367 = vmatpush.msra.mxu0 0.0
        %368 = vmatpush.msra.mxu0 0.0
        %369 = vmatpush.msra.mxu0 0.0
        %370 = vmatpush.msra.mxu0 0.0
        %371 = vmatpush.msra.mxu0 0.0
        %372 = vmatpush.msra.mxu0 0.0
        %373 = vmatpush.msra.mxu0 0.0
        %374 = vmatpush.msra.mxu0 0.0
        %375 = vmatpush.msra.mxu0 0.0
        %376 = vmatpush.msra.mxu0 0.0
        %377 = vmatpush.msra.mxu0 %v356
        %378 = vmatmul.f32.gmra.mxu0 %v360
        %v379 = vpop.f32.mrf.mxu0
        %v380 = vadd.f32 0.0, %v379
        %381 = vdwg.mxu0
        %382 = vmatpush.msra.mxu0 0.0
        %383 = vmatpush.msra.mxu0 0.0
        %384 = vmatpush.msra.mxu0 0.0
        %385 = vmatpush.msra.mxu0 0.0
        %386 = vmatpush.msra.mxu0 0.0
        %387 = vmatpush.msra.mxu0 0.0
        %388 = vmatpush.msra.mxu0 0.0
        %389 = vmatpush.msra.mxu0 0.0
        %390 = vmatpush.msra.mxu0 0.0
        %391 = vmatpush.msra.mxu0 0.0
        %392 = vmatpush.msra.mxu0 0.0
        %393 = vmatpush.msra.mxu0 0.0
        %394 = vmatpush.msra.mxu0 0.0
        %395 = vmatpush.msra.mxu0 0.0
        %396 = vmatpush.msra.mxu0 0.0
        %397 = vmatpush.msra.mxu0 %v357
        %398 = vmatmul.f32.gmra.mxu0 %v360
        %v399 = vpop.f32.mrf.mxu0
        %v400 = vadd.f32 0.0, %v399
        %401 = vdwg.mxu0
        %v403 = vsel %vm358, %v228, 0
        %405 = vmatpush.msra.mxu0 0.0
        %406 = vmatpush.msra.mxu0 0.0
        %407 = vmatpush.msra.mxu0 0.0
        %408 = vmatpush.msra.mxu0 0.0
        %409 = vmatpush.msra.mxu0 0.0
        %410 = vmatpush.msra.mxu0 0.0
        %411 = vmatpush.msra.mxu0 0.0
        %412 = vmatpush.msra.mxu0 0.0
        %413 = vmatpush.msra.mxu0 0.0
        %414 = vmatpush.msra.mxu0 0.0
        %415 = vmatpush.msra.mxu0 0.0
        %416 = vmatpush.msra.mxu0 0.0
        %417 = vmatpush.msra.mxu0 0.0
        %418 = vmatpush.msra.mxu0 0.0
        %419 = vmatpush.msra.mxu0 0.0
        %420 = vmatpush.msra.mxu0 %v356
        %421 = vmatmul.f32.gmra.mxu0 %v403
        %v422 = vpop.f32.mrf.mxu0
        %v423 = vadd.f32 0.0, %v422
        %424 = vdwg.mxu0
        %425 = vmatpush.msra.mxu0 0.0
        %426 = vmatpush.msra.mxu0 0.0
        %427 = vmatpush.msra.mxu0 0.0
        %428 = vmatpush.msra.mxu0 0.0
        %429 = vmatpush.msra.mxu0 0.0
        %430 = vmatpush.msra.mxu0 0.0
        %431 = vmatpush.msra.mxu0 0.0
        %432 = vmatpush.msra.mxu0 0.0
        %433 = vmatpush.msra.mxu0 0.0
        %434 = vmatpush.msra.mxu0 0.0
        %435 = vmatpush.msra.mxu0 0.0
        %436 = vmatpush.msra.mxu0 0.0
        %437 = vmatpush.msra.mxu0 0.0
        %438 = vmatpush.msra.mxu0 0.0
        %439 = vmatpush.msra.mxu0 0.0
        %440 = vmatpush.msra.mxu0 %v357
        %441 = vmatmul.f32.gmra.mxu0 %v403
        %v442 = vpop.f32.mrf.mxu0
        %v443 = vadd.f32 0.0, %v442
        %444 = vdwg.mxu0
        %445 = vset.pattern.permute.xlu0 3
        %446 = vperm.xlu0 %445, %v226
        %v447 = vpop.permute.xlu0 %446
        %v450 = vsel %vm358, %v229, 0
        %452 = vmatpush.msra.mxu0 0.0
        %453 = vmatpush.msra.mxu0 0.0
        %454 = vmatpush.msra.mxu0 0.0
        %455 = vmatpush.msra.mxu0 0.0
        %456 = vmatpush.msra.mxu0 0.0
        %457 = vmatpush.msra.mxu0 0.0
        %458 = vmatpush.msra.mxu0 0.0
        %459 = vmatpush.msra.mxu0 0.0
        %460 = vmatpush.msra.mxu0 0.0
        %461 = vmatpush.msra.mxu0 0.0
        %462 = vmatpush.msra.mxu0 0.0
        %463 = vmatpush.msra.mxu0 0.0
        %464 = vmatpush.msra.mxu0 0.0
        %465 = vmatpush.msra.mxu0 0.0
        %466 = vmatpush.msra.mxu0 0.0
        %467 = vmatpush.msra.mxu0 %v356
        %468 = vmatmul.f32.gmra.mxu0 %v450
        %v469 = vpop.f32.mrf.mxu0
        %v470 = vadd.f32 %v447, %v469
        %471 = vdwg.mxu0
        %472 = vmatpush.msra.mxu0 0.0
        %473 = vmatpush.msra.mxu0 0.0
        %474 = vmatpush.msra.mxu0 0.0
        %475 = vmatpush.msra.mxu0 0.0
        %476 = vmatpush.msra.mxu0 0.0
        %477 = vmatpush.msra.mxu0 0.0
        %478 = vmatpush.msra.mxu0 0.0
        %479 = vmatpush.msra.mxu0 0.0
        %480 = vmatpush.msra.mxu0 0.0
        %481 = vmatpush.msra.mxu0 0.0
        %482 = vmatpush.msra.mxu0 0.0
        %483 = vmatpush.msra.mxu0 0.0
        %484 = vmatpush.msra.mxu0 0.0
        %485 = vmatpush.msra.mxu0 0.0
        %486 = vmatpush.msra.mxu0 0.0
        %487 = vmatpush.msra.mxu0 %v357
        %488 = vmatmul.f32.gmra.mxu0 %v450
        %v489 = vpop.f32.mrf.mxu0
        %v490 = vadd.f32 %v447, %v489
        %491 = vdwg.mxu0
        %492 = vrot.lane.b32.xlu0 %v380, 1
        %v493 = vpop.permute.xlu0 %492
        %494 = vrot.lane.b32.xlu0 %v400, 1
        %v495 = vpop.permute.xlu0 %494
        %v496 = vlaneseq
        %v497 = vand.u32 %v496, 127
        %vm498 = vcmp.lt.s32.totalorder %v497, 1
        %v499 = vsel %vm498, %v493, %v495
        %v500 = vsel %vm498, %v495, %v493
        %v501 = vperm.slane %v231, 0
        %v502 = vperm.slane %v232, 0
        %v503 = vmul.f32 %v500, %v501
        %v504 = vmul.f32 %v499, %v502
        %505 = vrot.lane.b32.xlu0 %v380, 127
        %v506 = vpop.permute.xlu0 %505
        %507 = vrot.lane.b32.xlu0 %v400, 127
        %v508 = vpop.permute.xlu0 %507
        %vm509 = vcmp.lt.s32.totalorder %v497, 127
        %v510 = vsel %vm509, %v506, %v508
        %v511 = vsel %vm509, %v508, %v506
        %v512 = vperm.slane %v231, 1
        %v513 = vperm.slane %v232, 1
        %v514 = vmul.f32 %v510, %v512
        %v515 = vmul.f32 %v511, %v513
        %516 = vset.pattern.permute.xlu0 4
        %517 = vperm.xlu0 %516, %v226
        %v518 = vpop.permute.xlu0 %517
        %v520 = vmul.f32 %v518, %v503
        %v521 = vmul.f32 %v518, %v504
        %522 = vset.pattern.permute.xlu0 5
        %523 = vperm.xlu0 %522, %v226
        %v524 = vpop.permute.xlu0 %523
        %v526 = vmul.f32 %v524, %v380
        %v527 = vmul.f32 %v524, %v400
        %v528 = vadd.f32 %v520, %v526
        %v529 = vadd.f32 %v521, %v527
        %530 = vset.pattern.permute.xlu0 6
        %531 = vperm.xlu0 %530, %v226
        %v532 = vpop.permute.xlu0 %531
        %v534 = vmul.f32 %v532, %v514
        %v535 = vmul.f32 %v532, %v515
        %v536 = vadd.f32 %v528, %v534
        %v537 = vadd.f32 %v529, %v535
        %538 = vset.pattern.permute.xlu0 7
        %539 = vperm.xlu0 %538, %v226
        %v540 = vpop.permute.xlu0 %539
        %v542 = vmul.f32 %v540, %v503
        %v543 = vmul.f32 %v540, %v504
        %544 = vset.pattern.permute.xlu0 8
        %545 = vperm.xlu0 %544, %v226
        %v546 = vpop.permute.xlu0 %545
        %v548 = vmul.f32 %v546, %v380
        %v549 = vmul.f32 %v546, %v400
        %v550 = vadd.f32 %v542, %v548
        %v551 = vadd.f32 %v543, %v549
        %552 = vset.pattern.permute.xlu0 9
        %553 = vperm.xlu0 %552, %v226
        %v554 = vpop.permute.xlu0 %553
        %v556 = vmul.f32 %v554, %v514
        %v557 = vmul.f32 %v554, %v515
        %v558 = vadd.f32 %v550, %v556
        %v559 = vadd.f32 %v551, %v557
        %560 = vset.pattern.permute.xlu0 10
        %561 = vperm.xlu0 %560, %v226
        %v562 = vpop.permute.xlu0 %561
        %v564 = vmul.f32 %v562, %v503
        %v565 = vmul.f32 %v562, %v504
        %566 = vset.pattern.permute.xlu0 11
        %567 = vperm.xlu0 %566, %v226
        %v568 = vpop.permute.xlu0 %567
        %v570 = vmul.f32 %v568, %v380
        %v571 = vmul.f32 %v568, %v400
        %v572 = vadd.f32 %v564, %v570
        %v573 = vadd.f32 %v565, %v571
        %574 = vset.pattern.permute.xlu0 12
        %575 = vperm.xlu0 %574, %v226
        %v576 = vpop.permute.xlu0 %575
        %v578 = vmul.f32 %v576, %v514
        %v579 = vmul.f32 %v576, %v515
        %v580 = vadd.f32 %v572, %v578
        %v581 = vadd.f32 %v573, %v579
        %v582 = vadd.f32 %v470, %v558
        %v583 = vadd.f32 %v490, %v559
        %584 = vrot.lane.b32.xlu0 %v536, 16
        %v585 = vpop.permute.xlu0 %584
        %586 = vrot.lane.b32.xlu0 %v537, 16
        %v587 = vpop.permute.xlu0 %586
        %vm588 = vcmp.lt.s32.totalorder %v497, 16
        %v589 = vsel %vm588, %v585, %v587
        %v590 = vsel %vm588, %v587, %v585
        %v591 = vperm.slane %v231, 2
        %v592 = vperm.slane %v232, 2
        %v593 = vmul.f32 %v590, %v591
        %v594 = vmul.f32 %v589, %v592
        %v595 = vadd.f32 %v582, %v593
        %v596 = vadd.f32 %v583, %v594
        %597 = vrot.lane.b32.xlu0 %v580, 112
        %v598 = vpop.permute.xlu0 %597
        %599 = vrot.lane.b32.xlu0 %v581, 112
        %v600 = vpop.permute.xlu0 %599
        %vm601 = vcmp.lt.s32.totalorder %v497, 112
        %v602 = vsel %vm601, %v598, %v600
        %v603 = vsel %vm601, %v600, %v598
        %v604 = vperm.slane %v231, 3
        %v605 = vperm.slane %v232, 3
        %v606 = vmul.f32 %v602, %v604
        %v607 = vmul.f32 %v603, %v605
        %v608 = vadd.f32 %v595, %v606
        %v609 = vadd.f32 %v596, %v607
        %v610 = vadd.f32 %v608, %v609
        %611 = vadd.xlane.f32.xlu0 %v610
        %v612 = vpop.xlane.xlu0 %611
        %v613 = vmul.f32 %v612, 0.00390625
        %v614 = vadd.f32 %v423, %v443
        %615 = vadd.xlane.f32.xlu0 %v614
        %v616 = vpop.xlane.xlu0 %615
        %v617 = vmul.f32 %v616, 0.00390625
        %v618 = vmax.f32 %v613, %v617
        %v619 = vand.u32 %v234, 1
        %vm620 = vcmp.eq.s32.totalorder %v619, 0
        %v621 = vrot.slane %v618, 1
        %v622 = vrot.slane %v618, 7
        %v623 = vsel %vm620, %v621, %v622
        %v624 = vmax.f32 %v618, %v623
        %v625 = vand.u32 %v234, 2
        %vm626 = vcmp.eq.s32.totalorder %v625, 0
        %v627 = vrot.slane %v624, 2
        %v628 = vrot.slane %v624, 6
        %v629 = vsel %vm626, %v627, %v628
        %v630 = vmax.f32 %v624, %v629
        %v631 = vrot.slane %v630, 4
        %v632 = vmax.f32 %v630, %v631
        %v633 = vsub.f32 %v613, %v632
        %v634 = vmul.f32 %v633, 1.442695
        %v635 = vpow.pop %v634
        %v636 = vsub.f32 %v617, %v632
        %v637 = vmul.f32 %v636, 1.442695
        %v638 = vpow.pop %v637
        %v639 = vadd.f32 %v635, %v638
        %v640 = vrot.slane %v639, 1
        %v641 = vrot.slane %v639, 7
        %v642 = vsel %vm620, %v640, %v641
        %v643 = vadd.f32 %v639, %v642
        %v644 = vrot.slane %v643, 2
        %v645 = vrot.slane %v643, 6
        %v646 = vsel %vm626, %v644, %v645
        %v647 = vadd.f32 %v643, %v646
        %v648 = vrot.slane %v647, 4
        %v649 = vadd.f32 %v647, %v648
        %v650 = vrcp.pop %v649
        %v651 = vmul.f32 %v649, %v650
        %v652 = vsub.f32 1.0, %v651
        %v653 = vmul.f32 %v650, %v652
        %v654 = vadd.f32 %v650, %v653
        %vm655 = vweird.f32 %v649
        %vm656 = vweird.f32 %v650
        %vm657 = vmor %vm655, %vm656
        %v658 = vsel %vm657, %v650, %v654
        %v659 = vand.u32 2147483647, %v649
        %vm660 = vcmp.eq.f32.partialorder %v659, 8.507059e+37
        %v661 = vand.u32 %v649, 2147483648
        %v662 = vor.u32 1.1754944e-38, %v661
        %v663 = vsel %vm660, %v662, %v658
        %v664 = vmul.f32 %v635, %v663
        %v665 = vmul.f32 %v638, %v663
        %667 = vset.pattern.permute.xlu0 0
        %668 = vperm.xlu0 %667, %v664
        %v669 = vpop.permute.xlu0 %668
        %v671 = vmul.f32 %v608, %v669
        %v672 = vmul.f32 %v609, %v669
        %674 = vset.pattern.permute.xlu0 0
        %675 = vperm.xlu0 %674, %v665
        %v676 = vpop.permute.xlu0 %675
        %v678 = vmul.f32 %v423, %v676
        %v679 = vmul.f32 %v443, %v676
        %v680 = vadd.f32 %v671, %v678
        %v681 = vadd.f32 %v672, %v679
        %682 = vst [vmem:[%s220] sm:$0xff] %v680
        %683 = vst [vmem:[%s220 + $0x8] sm:$0xff] %v681
        %s684 = sand.u32 %s117, 1
        %s685 = scalar_lea.sflag [#allocation4], %s684
        %s686 = sand.u32 %s117, 1
        %s687 = smul.addr %s686, 16
        %s688 = scalar_lea.vmem [#allocation7], %s687
        // Predicated region
        $region45: #{tpu_custom_call.1} parent=35 // pred_check
          %p689 = pneg %p127
        $region46: #{tpu_custom_call.1} parent=35 // pred_check_branch
          %691 = sbr.rel (%p689) target = $region48
        $region47: #{tpu_custom_call.1} parent=35 // pred_region
          %693 = vsyncadd %s685, 0
          %s694 = smul.addr %s20, 2
          %s695 = smul.addr %s694, 8
          %s696 = scalar_lea.hbm %s4, %s695
          %s698 = sshll.u32 %s688, 4
          %s699 = int_to_ptr.vmem [resolvable:$true] %s698
          %s700 = sshll.u32 %s696, 4
          %s701 = int_to_ptr.hbm [resolvable:$true] %s700
          %703 = dma.vmem_to_hbm [thread:$0]  %s699, 256, %s701, %s685
        $region48: #{tpu_custom_call.1} parent=35 // pred_fallthru
          _
      $region36: #{tpu_custom_call.1} parent=5 // pred_fallthru
        _
      %p704 = scmp.le.s32.totalorder 2, %s15
      // Predicated region
      $region49: #{tpu_custom_call.1} parent=5 // pred_check
        %p705 = pneg %p704
      $region50: #{tpu_custom_call.1} parent=5 // pred_check_branch
        %707 = sbr.rel (%p705) target = $region52
      $region51: #{tpu_custom_call.1} parent=5 // pred_region
        %s708 = ssub.s32 %s15, 2
        // Predicated region
        $region53: #{tpu_custom_call.1} parent=51 // pred_check
          %p709 = pneg %p133
        $region54: #{tpu_custom_call.1} parent=51 // pred_check_branch
          %711 = sbr.rel (%p709) target = $region56
        $region55: #{tpu_custom_call.1} parent=51 // pred_region
          %s712 = sand.u32 %s118, 1
          %s713 = scalar_lea.sflag [#allocation4], %s712
          %s714 = sand.u32 %s118, 1
          %s715 = smul.addr %s714, 16
          %s716 = scalar_lea.vmem [#allocation7], %s715
          %718 = dma.done %s713, 256
        $region56: #{tpu_custom_call.1} parent=51 // pred_fallthru
          _
      $region52: #{tpu_custom_call.1} parent=5 // pred_fallthru
        _
    $region6: #{tpu_custom_call.1} parent=1 // loop_footer
      %s19 = sadd.s32 1, %s15
    $region7: #{tpu_custom_call.1} parent=1 // loop_footer_branch
      %14 = sbr.rel target = $region3
    $region8: #{tpu_custom_call.1} parent=1 // loop_exit
      _
    %719 = vsyncpa [#allocation3], 1
    %s720 = scalar_lea.sflag [#allocation3], 1
    %721 = vsyncpa %s720, 1
    %722 = vsyncpa [#allocation6], 1
    %723 = vsyncpa [#allocation4], 1
    %s724 = scalar_lea.sflag [#allocation4], 1
    %725 = vsyncpa %s724, 1

</llo_original>
